<compile_context>
chip_gen: v6e
topology: v6e:2x2x1
jax: 0.10.0
libtpu: 0.0.40
codegen_flags: <defaults>
</compile_context>

<pallas_src>
import jax
import jax.numpy as jnp
from jax.experimental import pallas as pl
from jax.experimental.pallas import tpu as pltpu


def clip_embedding_kernel(tokens_smem, tok_table_hbm, pos_emb_ref, out_ref,
                          gather_buf, sem):
    # tokens_smem:   (B, T_pad) int32 in SMEM (scalar-prefetched)
    # tok_table_hbm: (V, E) token embedding table, left in HBM
    # pos_emb_ref:   (T_pad, E) position embedding, resident in VMEM
    # out_ref:       (TILE_T, E) output tile (leading batch dim squeezed)
    # gather_buf:    (TILE_T, E) VMEM scratch for the gathered table rows
    # sem:           (TILE_T,) DMA semaphores
    b = pl.program_id(0)
    tt = pl.program_id(1)
    tile_t = gather_buf.shape[0]

    # Issue all TILE_T row-gather DMAs (HBM table -> VMEM scratch), then wait.
    for i in range(tile_t):                       # static unroll
        tok_id = tokens_smem[b, tt * tile_t + i]  # scalar read from SMEM
        pltpu.make_async_copy(
            tok_table_hbm.at[pl.ds(tok_id, 1)],
            gather_buf.at[pl.ds(i, 1)],
            sem.at[i],
        ).start()
    for i in range(tile_t):
        pltpu.make_async_copy(
            tok_table_hbm.at[pl.ds(0, 1)],        # wait keys off dst/sem; shape matches
            gather_buf.at[pl.ds(i, 1)],
            sem.at[i],
        ).wait()

    # Position rows for this T-tile (pos table stays in VMEM across the grid).
    t0 = pl.multiple_of(tt * tile_t, tile_t)
    pos_tile = pos_emb_ref[pl.ds(t0, tile_t), :]

    out_ref[...] = (gather_buf[...] + pos_tile).astype(out_ref.dtype)


def clip_embedding(tokens, token_embedding, position_embedding, *, tile_t=8):
    B, T = tokens.shape
    V, E = token_embedding.shape
    assert position_embedding.shape == (T, E)

    # Guard against out-of-range ids (padding sentinels etc.) before the HBM gather.
    tokens = jnp.clip(tokens.astype(jnp.int32), 0, V - 1)

    # Pad T to a multiple of tile_t; padded rows gather row 0 and are sliced off.
    t_pad = pl.cdiv(T, tile_t) * tile_t
    if t_pad != T:
        tokens = jnp.pad(tokens, ((0, 0), (0, t_pad - T)))
        position_embedding = jnp.pad(position_embedding,
                                     ((0, t_pad - T), (0, 0)))

    grid = (B, t_pad // tile_t)

    grid_spec = pltpu.PrefetchScalarGridSpec(
        num_scalar_prefetch=1,            # `tokens` lands in SMEM
        grid=grid,
        in_specs=[
            # token table: stays in HBM, gathered manually inside the kernel
            pl.BlockSpec(memory_space=pl.ANY),
            # position table: single full-extent block, constant index -> VMEM-resident
            pl.BlockSpec((t_pad, E), lambda b, tt, tok: (0, 0)),
        ],
        out_specs=pl.BlockSpec((pl.Squeezed(), tile_t, E),
                               lambda b, tt, tok: (b, tt, 0)),
        scratch_shapes=[
            pltpu.VMEM((tile_t, E), token_embedding.dtype),
            pltpu.SemaphoreType.DMA((tile_t,)),
        ],
    )

    dsize = jnp.dtype(token_embedding.dtype).itemsize
    cost = pl.CostEstimate(
        flops=B * t_pad * E,
        transcendentals=0,
        bytes_accessed=(2 * B * t_pad * E * dsize     # gather reads + output writes
                        + t_pad * E * dsize           # position table
                        + B * t_pad * 4),             # token ids
    )

    out = pl.pallas_call(
        clip_embedding_kernel,
        out_shape=jax.ShapeDtypeStruct((B, t_pad, E), token_embedding.dtype),
        grid_spec=grid_spec,
        compiler_params=pltpu.CompilerParams(
            dimension_semantics=("parallel", "parallel")),
        cost_estimate=cost,
    )(tokens, token_embedding, position_embedding)

    return out[:, :T, :]


if __name__ == "__main__":
    # Small shapes consistent with the module: n_vocab=64, n_embed=128, n_tokens=8, batch=2
    n_vocab, n_embed, n_tokens, batch = 64, 128, 8, 2

    key = jax.random.PRNGKey(0)
    k_tok, k_emb, k_pos = jax.random.split(key, 3)

    tokens = jax.random.randint(k_tok, (batch, n_tokens), 0, n_vocab, dtype=jnp.int32)
    # nn.Embedding default init ~ N(0, 1); position_embedding is torch.zeros in __init__,
    # but we use a deterministic random init here so the add is actually exercised.
    token_embedding = jax.random.normal(k_emb, (n_vocab, n_embed), dtype=jnp.float32)
    position_embedding = 0.01 * jax.random.normal(
        k_pos, (n_tokens, n_embed), dtype=jnp.float32)

    out = clip_embedding(tokens, token_embedding, position_embedding)
    out = jax.block_until_ready(out)

    # Reference check against plain-JAX semantics of the PyTorch forward.
    ref = jnp.take(token_embedding, tokens, axis=0) + position_embedding[None, :, :]
    assert out.shape == (batch, n_tokens, n_embed)
    assert jnp.allclose(out, ref, atol=1e-6, rtol=1e-6)

    print("KERNEL_OK")
</pallas_src>

<mosaic_0001>
module attributes {stable_mosaic.version = 11 : i64} {
  func.func @clip_embedding_kernel(%arg0: i32, %arg1: i32, %arg2: memref<2x8xi32, #tpu.memory_space<smem>>, %arg3: memref<64x128xf32, #tpu.memory_space<any>>, %arg4: memref<8x128xf32, #tpu.memory_space<vmem>>, %arg5: memref<1x8x128xf32, #tpu.memory_space<vmem>>, %arg6: memref<8x128xf32, #tpu.memory_space<vmem>>, %arg7: memref<8x!tpu.dma_semaphore, #tpu.memory_space<semaphore_mem>>) attributes {dimension_semantics = [#tpu.dimension_semantics<parallel>, #tpu.dimension_semantics<parallel>], iteration_bounds = array<i64: 2, 1>, scalar_prefetch = 1 : i64, scratch_operands = 2 : i64, tpu.core_type = #tpu.core_type<tc>, window_params = [{}, {pipeline_mode = #tpu.pipeline_mode<synchronous>, transform_indices = @transform_1, window_bounds = array<i64: 8, 128>}, {transform_indices = @transform_2, window_bounds = array<i64: 1, 8, 128>}]} {
    %c8_i32 = arith.constant 8 : i32
    %0 = arith.muli %arg1, %c8_i32 : i32
    %c0_i32 = arith.constant 0 : i32
    %1 = arith.addi %0, %c0_i32 : i32
    %2 = arith.index_cast %arg0 : i32 to index
    %3 = arith.index_cast %1 : i32 to index
    %4 = memref.load %arg2[%2, %3] : memref<2x8xi32, #tpu.memory_space<smem>>
    %c0_i32_0 = arith.constant 0 : i32
    %c0_i32_1 = arith.constant 0 : i32
    %5 = tpu.memref_slice %arg3[%4, %c0_i32_1] : memref<64x128xf32, #tpu.memory_space<any>> -> memref<1x128xf32, #tpu.memory_space<any>>
    %c0_i32_2 = arith.constant 0 : i32
    %c0_i32_3 = arith.constant 0 : i32
    %6 = tpu.memref_slice %arg6[%c0_i32_2, %c0_i32_3] : memref<8x128xf32, #tpu.memory_space<vmem>> -> memref<1x128xf32, #tpu.memory_space<vmem>>
    %7 = tpu.memref_slice %arg7[%c0_i32_0] : memref<8x!tpu.dma_semaphore, #tpu.memory_space<semaphore_mem>> -> memref<1x!tpu.dma_semaphore, #tpu.memory_space<semaphore_mem>>
    %8 = tpu.memref_squeeze %7 : memref<1x!tpu.dma_semaphore, #tpu.memory_space<semaphore_mem>> -> memref<!tpu.dma_semaphore, #tpu.memory_space<semaphore_mem>>
    tpu.enqueue_dma source(%5 : memref<1x128xf32, #tpu.memory_space<any>>) target(%6 : memref<1x128xf32, #tpu.memory_space<vmem>>) target_semaphore(%8 : memref<!tpu.dma_semaphore, #tpu.memory_space<semaphore_mem>>)
    %c8_i32_4 = arith.constant 8 : i32
    %9 = arith.muli %arg1, %c8_i32_4 : i32
    %c1_i32 = arith.constant 1 : i32
    %10 = arith.addi %9, %c1_i32 : i32
    %11 = arith.index_cast %arg0 : i32 to index
    %12 = arith.index_cast %10 : i32 to index
    %13 = memref.load %arg2[%11, %12] : memref<2x8xi32, #tpu.memory_space<smem>>
    %c1_i32_5 = arith.constant 1 : i32
    %c0_i32_6 = arith.constant 0 : i32
    %14 = tpu.memref_slice %arg3[%13, %c0_i32_6] : memref<64x128xf32, #tpu.memory_space<any>> -> memref<1x128xf32, #tpu.memory_space<any>>
    %c1_i32_7 = arith.constant 1 : i32
    %c0_i32_8 = arith.constant 0 : i32
    %15 = tpu.memref_slice %arg6[%c1_i32_7, %c0_i32_8] : memref<8x128xf32, #tpu.memory_space<vmem>> -> memref<1x128xf32, #tpu.memory_space<vmem>>
    %16 = tpu.memref_slice %arg7[%c1_i32_5] : memref<8x!tpu.dma_semaphore, #tpu.memory_space<semaphore_mem>> -> memref<1x!tpu.dma_semaphore, #tpu.memory_space<semaphore_mem>>
    %17 = tpu.memref_squeeze %16 : memref<1x!tpu.dma_semaphore, #tpu.memory_space<semaphore_mem>> -> memref<!tpu.dma_semaphore, #tpu.memory_space<semaphore_mem>>
    tpu.enqueue_dma source(%14 : memref<1x128xf32, #tpu.memory_space<any>>) target(%15 : memref<1x128xf32, #tpu.memory_space<vmem>>) target_semaphore(%17 : memref<!tpu.dma_semaphore, #tpu.memory_space<semaphore_mem>>)
    %c8_i32_9 = arith.constant 8 : i32
    %18 = arith.muli %arg1, %c8_i32_9 : i32
    %c2_i32 = arith.constant 2 : i32
    %19 = arith.addi %18, %c2_i32 : i32
    %20 = arith.index_cast %arg0 : i32 to index
    %21 = arith.index_cast %19 : i32 to index
    %22 = memref.load %arg2[%20, %21] : memref<2x8xi32, #tpu.memory_space<smem>>
    %c2_i32_10 = arith.constant 2 : i32
    %c0_i32_11 = arith.constant 0 : i32
    %23 = tpu.memref_slice %arg3[%22, %c0_i32_11] : memref<64x128xf32, #tpu.memory_space<any>> -> memref<1x128xf32, #tpu.memory_space<any>>
    %c2_i32_12 = arith.constant 2 : i32
    %c0_i32_13 = arith.constant 0 : i32
    %24 = tpu.memref_slice %arg6[%c2_i32_12, %c0_i32_13] : memref<8x128xf32, #tpu.memory_space<vmem>> -> memref<1x128xf32, #tpu.memory_space<vmem>>
    %25 = tpu.memref_slice %arg7[%c2_i32_10] : memref<8x!tpu.dma_semaphore, #tpu.memory_space<semaphore_mem>> -> memref<1x!tpu.dma_semaphore, #tpu.memory_space<semaphore_mem>>
    %26 = tpu.memref_squeeze %25 : memref<1x!tpu.dma_semaphore, #tpu.memory_space<semaphore_mem>> -> memref<!tpu.dma_semaphore, #tpu.memory_space<semaphore_mem>>
    tpu.enqueue_dma source(%23 : memref<1x128xf32, #tpu.memory_space<any>>) target(%24 : memref<1x128xf32, #tpu.memory_space<vmem>>) target_semaphore(%26 : memref<!tpu.dma_semaphore, #tpu.memory_space<semaphore_mem>>)
    %c8_i32_14 = arith.constant 8 : i32
    %27 = arith.muli %arg1, %c8_i32_14 : i32
    %c3_i32 = arith.constant 3 : i32
    %28 = arith.addi %27, %c3_i32 : i32
    %29 = arith.index_cast %arg0 : i32 to index
    %30 = arith.index_cast %28 : i32 to index
    %31 = memref.load %arg2[%29, %30] : memref<2x8xi32, #tpu.memory_space<smem>>
    %c3_i32_15 = arith.constant 3 : i32
    %c0_i32_16 = arith.constant 0 : i32
    %32 = tpu.memref_slice %arg3[%31, %c0_i32_16] : memref<64x128xf32, #tpu.memory_space<any>> -> memref<1x128xf32, #tpu.memory_space<any>>
    %c3_i32_17 = arith.constant 3 : i32
    %c0_i32_18 = arith.constant 0 : i32
    %33 = tpu.memref_slice %arg6[%c3_i32_17, %c0_i32_18] : memref<8x128xf32, #tpu.memory_space<vmem>> -> memref<1x128xf32, #tpu.memory_space<vmem>>
    %34 = tpu.memref_slice %arg7[%c3_i32_15] : memref<8x!tpu.dma_semaphore, #tpu.memory_space<semaphore_mem>> -> memref<1x!tpu.dma_semaphore, #tpu.memory_space<semaphore_mem>>
    %35 = tpu.memref_squeeze %34 : memref<1x!tpu.dma_semaphore, #tpu.memory_space<semaphore_mem>> -> memref<!tpu.dma_semaphore, #tpu.memory_space<semaphore_mem>>
    tpu.enqueue_dma source(%32 : memref<1x128xf32, #tpu.memory_space<any>>) target(%33 : memref<1x128xf32, #tpu.memory_space<vmem>>) target_semaphore(%35 : memref<!tpu.dma_semaphore, #tpu.memory_space<semaphore_mem>>)
    %c8_i32_19 = arith.constant 8 : i32
    %36 = arith.muli %arg1, %c8_i32_19 : i32
    %c4_i32 = arith.constant 4 : i32
    %37 = arith.addi %36, %c4_i32 : i32
    %38 = arith.index_cast %arg0 : i32 to index
    %39 = arith.index_cast %37 : i32 to index
    %40 = memref.load %arg2[%38, %39] : memref<2x8xi32, #tpu.memory_space<smem>>
    %c4_i32_20 = arith.constant 4 : i32
    %c0_i32_21 = arith.constant 0 : i32
    %41 = tpu.memref_slice %arg3[%40, %c0_i32_21] : memref<64x128xf32, #tpu.memory_space<any>> -> memref<1x128xf32, #tpu.memory_space<any>>
    %c4_i32_22 = arith.constant 4 : i32
    %c0_i32_23 = arith.constant 0 : i32
    %42 = tpu.memref_slice %arg6[%c4_i32_22, %c0_i32_23] : memref<8x128xf32, #tpu.memory_space<vmem>> -> memref<1x128xf32, #tpu.memory_space<vmem>>
    %43 = tpu.memref_slice %arg7[%c4_i32_20] : memref<8x!tpu.dma_semaphore, #tpu.memory_space<semaphore_mem>> -> memref<1x!tpu.dma_semaphore, #tpu.memory_space<semaphore_mem>>
    %44 = tpu.memref_squeeze %43 : memref<1x!tpu.dma_semaphore, #tpu.memory_space<semaphore_mem>> -> memref<!tpu.dma_semaphore, #tpu.memory_space<semaphore_mem>>
    tpu.enqueue_dma source(%41 : memref<1x128xf32, #tpu.memory_space<any>>) target(%42 : memref<1x128xf32, #tpu.memory_space<vmem>>) target_semaphore(%44 : memref<!tpu.dma_semaphore, #tpu.memory_space<semaphore_mem>>)
    %c8_i32_24 = arith.constant 8 : i32
    %45 = arith.muli %arg1, %c8_i32_24 : i32
    %c5_i32 = arith.constant 5 : i32
    %46 = arith.addi %45, %c5_i32 : i32
    %47 = arith.index_cast %arg0 : i32 to index
    %48 = arith.index_cast %46 : i32 to index
    %49 = memref.load %arg2[%47, %48] : memref<2x8xi32, #tpu.memory_space<smem>>
    %c5_i32_25 = arith.constant 5 : i32
    %c0_i32_26 = arith.constant 0 : i32
    %50 = tpu.memref_slice %arg3[%49, %c0_i32_26] : memref<64x128xf32, #tpu.memory_space<any>> -> memref<1x128xf32, #tpu.memory_space<any>>
    %c5_i32_27 = arith.constant 5 : i32
    %c0_i32_28 = arith.constant 0 : i32
    %51 = tpu.memref_slice %arg6[%c5_i32_27, %c0_i32_28] : memref<8x128xf32, #tpu.memory_space<vmem>> -> memref<1x128xf32, #tpu.memory_space<vmem>>
    %52 = tpu.memref_slice %arg7[%c5_i32_25] : memref<8x!tpu.dma_semaphore, #tpu.memory_space<semaphore_mem>> -> memref<1x!tpu.dma_semaphore, #tpu.memory_space<semaphore_mem>>
    %53 = tpu.memref_squeeze %52 : memref<1x!tpu.dma_semaphore, #tpu.memory_space<semaphore_mem>> -> memref<!tpu.dma_semaphore, #tpu.memory_space<semaphore_mem>>
    tpu.enqueue_dma source(%50 : memref<1x128xf32, #tpu.memory_space<any>>) target(%51 : memref<1x128xf32, #tpu.memory_space<vmem>>) target_semaphore(%53 : memref<!tpu.dma_semaphore, #tpu.memory_space<semaphore_mem>>)
    %c8_i32_29 = arith.constant 8 : i32
    %54 = arith.muli %arg1, %c8_i32_29 : i32
    %c6_i32 = arith.constant 6 : i32
    %55 = arith.addi %54, %c6_i32 : i32
    %56 = arith.index_cast %arg0 : i32 to index
    %57 = arith.index_cast %55 : i32 to index
    %58 = memref.load %arg2[%56, %57] : memref<2x8xi32, #tpu.memory_space<smem>>
    %c6_i32_30 = arith.constant 6 : i32
    %c0_i32_31 = arith.constant 0 : i32
    %59 = tpu.memref_slice %arg3[%58, %c0_i32_31] : memref<64x128xf32, #tpu.memory_space<any>> -> memref<1x128xf32, #tpu.memory_space<any>>
    %c6_i32_32 = arith.constant 6 : i32
    %c0_i32_33 = arith.constant 0 : i32
    %60 = tpu.memref_slice %arg6[%c6_i32_32, %c0_i32_33] : memref<8x128xf32, #tpu.memory_space<vmem>> -> memref<1x128xf32, #tpu.memory_space<vmem>>
    %61 = tpu.memref_slice %arg7[%c6_i32_30] : memref<8x!tpu.dma_semaphore, #tpu.memory_space<semaphore_mem>> -> memref<1x!tpu.dma_semaphore, #tpu.memory_space<semaphore_mem>>
    %62 = tpu.memref_squeeze %61 : memref<1x!tpu.dma_semaphore, #tpu.memory_space<semaphore_mem>> -> memref<!tpu.dma_semaphore, #tpu.memory_space<semaphore_mem>>
    tpu.enqueue_dma source(%59 : memref<1x128xf32, #tpu.memory_space<any>>) target(%60 : memref<1x128xf32, #tpu.memory_space<vmem>>) target_semaphore(%62 : memref<!tpu.dma_semaphore, #tpu.memory_space<semaphore_mem>>)
    %c8_i32_34 = arith.constant 8 : i32
    %63 = arith.muli %arg1, %c8_i32_34 : i32
    %c7_i32 = arith.constant 7 : i32
    %64 = arith.addi %63, %c7_i32 : i32
    %65 = arith.index_cast %arg0 : i32 to index
    %66 = arith.index_cast %64 : i32 to index
    %67 = memref.load %arg2[%65, %66] : memref<2x8xi32, #tpu.memory_space<smem>>
    %c7_i32_35 = arith.constant 7 : i32
    %c0_i32_36 = arith.constant 0 : i32
    %68 = tpu.memref_slice %arg3[%67, %c0_i32_36] : memref<64x128xf32, #tpu.memory_space<any>> -> memref<1x128xf32, #tpu.memory_space<any>>
    %c7_i32_37 = arith.constant 7 : i32
    %c0_i32_38 = arith.constant 0 : i32
    %69 = tpu.memref_slice %arg6[%c7_i32_37, %c0_i32_38] : memref<8x128xf32, #tpu.memory_space<vmem>> -> memref<1x128xf32, #tpu.memory_space<vmem>>
    %70 = tpu.memref_slice %arg7[%c7_i32_35] : memref<8x!tpu.dma_semaphore, #tpu.memory_space<semaphore_mem>> -> memref<1x!tpu.dma_semaphore, #tpu.memory_space<semaphore_mem>>
    %71 = tpu.memref_squeeze %70 : memref<1x!tpu.dma_semaphore, #tpu.memory_space<semaphore_mem>> -> memref<!tpu.dma_semaphore, #tpu.memory_space<semaphore_mem>>
    tpu.enqueue_dma source(%68 : memref<1x128xf32, #tpu.memory_space<any>>) target(%69 : memref<1x128xf32, #tpu.memory_space<vmem>>) target_semaphore(%71 : memref<!tpu.dma_semaphore, #tpu.memory_space<semaphore_mem>>)
    %c0_i32_39 = arith.constant 0 : i32
    %c0_i32_40 = arith.constant 0 : i32
    %c0_i32_41 = arith.constant 0 : i32
    %72 = tpu.memref_slice %arg3[%c0_i32_40, %c0_i32_41] : memref<64x128xf32, #tpu.memory_space<any>> -> memref<1x128xf32, #tpu.memory_space<any>>
    %c0_i32_42 = arith.constant 0 : i32
    %c0_i32_43 = arith.constant 0 : i32
    %73 = tpu.memref_slice %arg6[%c0_i32_42, %c0_i32_43] : memref<8x128xf32, #tpu.memory_space<vmem>> -> memref<1x128xf32, #tpu.memory_space<vmem>>
    %74 = tpu.memref_slice %arg7[%c0_i32_39] : memref<8x!tpu.dma_semaphore, #tpu.memory_space<semaphore_mem>> -> memref<1x!tpu.dma_semaphore, #tpu.memory_space<semaphore_mem>>
    %75 = tpu.memref_squeeze %74 : memref<1x!tpu.dma_semaphore, #tpu.memory_space<semaphore_mem>> -> memref<!tpu.dma_semaphore, #tpu.memory_space<semaphore_mem>>
    tpu.wait_dma2 semaphore(%75 : memref<!tpu.dma_semaphore, #tpu.memory_space<semaphore_mem>>) src(%72 : memref<1x128xf32, #tpu.memory_space<any>>) dst(%73 : memref<1x128xf32, #tpu.memory_space<vmem>>)
    %c1_i32_44 = arith.constant 1 : i32
    %c0_i32_45 = arith.constant 0 : i32
    %c0_i32_46 = arith.constant 0 : i32
    %76 = tpu.memref_slice %arg3[%c0_i32_45, %c0_i32_46] : memref<64x128xf32, #tpu.memory_space<any>> -> memref<1x128xf32, #tpu.memory_space<any>>
    %c1_i32_47 = arith.constant 1 : i32
    %c0_i32_48 = arith.constant 0 : i32
    %77 = tpu.memref_slice %arg6[%c1_i32_47, %c0_i32_48] : memref<8x128xf32, #tpu.memory_space<vmem>> -> memref<1x128xf32, #tpu.memory_space<vmem>>
    %78 = tpu.memref_slice %arg7[%c1_i32_44] : memref<8x!tpu.dma_semaphore, #tpu.memory_space<semaphore_mem>> -> memref<1x!tpu.dma_semaphore, #tpu.memory_space<semaphore_mem>>
    %79 = tpu.memref_squeeze %78 : memref<1x!tpu.dma_semaphore, #tpu.memory_space<semaphore_mem>> -> memref<!tpu.dma_semaphore, #tpu.memory_space<semaphore_mem>>
    tpu.wait_dma2 semaphore(%79 : memref<!tpu.dma_semaphore, #tpu.memory_space<semaphore_mem>>) src(%76 : memref<1x128xf32, #tpu.memory_space<any>>) dst(%77 : memref<1x128xf32, #tpu.memory_space<vmem>>)
    %c2_i32_49 = arith.constant 2 : i32
    %c0_i32_50 = arith.constant 0 : i32
    %c0_i32_51 = arith.constant 0 : i32
    %80 = tpu.memref_slice %arg3[%c0_i32_50, %c0_i32_51] : memref<64x128xf32, #tpu.memory_space<any>> -> memref<1x128xf32, #tpu.memory_space<any>>
    %c2_i32_52 = arith.constant 2 : i32
    %c0_i32_53 = arith.constant 0 : i32
    %81 = tpu.memref_slice %arg6[%c2_i32_52, %c0_i32_53] : memref<8x128xf32, #tpu.memory_space<vmem>> -> memref<1x128xf32, #tpu.memory_space<vmem>>
    %82 = tpu.memref_slice %arg7[%c2_i32_49] : memref<8x!tpu.dma_semaphore, #tpu.memory_space<semaphore_mem>> -> memref<1x!tpu.dma_semaphore, #tpu.memory_space<semaphore_mem>>
    %83 = tpu.memref_squeeze %82 : memref<1x!tpu.dma_semaphore, #tpu.memory_space<semaphore_mem>> -> memref<!tpu.dma_semaphore, #tpu.memory_space<semaphore_mem>>
    tpu.wait_dma2 semaphore(%83 : memref<!tpu.dma_semaphore, #tpu.memory_space<semaphore_mem>>) src(%80 : memref<1x128xf32, #tpu.memory_space<any>>) dst(%81 : memref<1x128xf32, #tpu.memory_space<vmem>>)
    %c3_i32_54 = arith.constant 3 : i32
    %c0_i32_55 = arith.constant 0 : i32
    %c0_i32_56 = arith.constant 0 : i32
    %84 = tpu.memref_slice %arg3[%c0_i32_55, %c0_i32_56] : memref<64x128xf32, #tpu.memory_space<any>> -> memref<1x128xf32, #tpu.memory_space<any>>
    %c3_i32_57 = arith.constant 3 : i32
    %c0_i32_58 = arith.constant 0 : i32
    %85 = tpu.memref_slice %arg6[%c3_i32_57, %c0_i32_58] : memref<8x128xf32, #tpu.memory_space<vmem>> -> memref<1x128xf32, #tpu.memory_space<vmem>>
    %86 = tpu.memref_slice %arg7[%c3_i32_54] : memref<8x!tpu.dma_semaphore, #tpu.memory_space<semaphore_mem>> -> memref<1x!tpu.dma_semaphore, #tpu.memory_space<semaphore_mem>>
    %87 = tpu.memref_squeeze %86 : memref<1x!tpu.dma_semaphore, #tpu.memory_space<semaphore_mem>> -> memref<!tpu.dma_semaphore, #tpu.memory_space<semaphore_mem>>
    tpu.wait_dma2 semaphore(%87 : memref<!tpu.dma_semaphore, #tpu.memory_space<semaphore_mem>>) src(%84 : memref<1x128xf32, #tpu.memory_space<any>>) dst(%85 : memref<1x128xf32, #tpu.memory_space<vmem>>)
    %c4_i32_59 = arith.constant 4 : i32
    %c0_i32_60 = arith.constant 0 : i32
    %c0_i32_61 = arith.constant 0 : i32
    %88 = tpu.memref_slice %arg3[%c0_i32_60, %c0_i32_61] : memref<64x128xf32, #tpu.memory_space<any>> -> memref<1x128xf32, #tpu.memory_space<any>>
    %c4_i32_62 = arith.constant 4 : i32
    %c0_i32_63 = arith.constant 0 : i32
    %89 = tpu.memref_slice %arg6[%c4_i32_62, %c0_i32_63] : memref<8x128xf32, #tpu.memory_space<vmem>> -> memref<1x128xf32, #tpu.memory_space<vmem>>
    %90 = tpu.memref_slice %arg7[%c4_i32_59] : memref<8x!tpu.dma_semaphore, #tpu.memory_space<semaphore_mem>> -> memref<1x!tpu.dma_semaphore, #tpu.memory_space<semaphore_mem>>
    %91 = tpu.memref_squeeze %90 : memref<1x!tpu.dma_semaphore, #tpu.memory_space<semaphore_mem>> -> memref<!tpu.dma_semaphore, #tpu.memory_space<semaphore_mem>>
    tpu.wait_dma2 semaphore(%91 : memref<!tpu.dma_semaphore, #tpu.memory_space<semaphore_mem>>) src(%88 : memref<1x128xf32, #tpu.memory_space<any>>) dst(%89 : memref<1x128xf32, #tpu.memory_space<vmem>>)
    %c5_i32_64 = arith.constant 5 : i32
    %c0_i32_65 = arith.constant 0 : i32
    %c0_i32_66 = arith.constant 0 : i32
    %92 = tpu.memref_slice %arg3[%c0_i32_65, %c0_i32_66] : memref<64x128xf32, #tpu.memory_space<any>> -> memref<1x128xf32, #tpu.memory_space<any>>
    %c5_i32_67 = arith.constant 5 : i32
    %c0_i32_68 = arith.constant 0 : i32
    %93 = tpu.memref_slice %arg6[%c5_i32_67, %c0_i32_68] : memref<8x128xf32, #tpu.memory_space<vmem>> -> memref<1x128xf32, #tpu.memory_space<vmem>>
    %94 = tpu.memref_slice %arg7[%c5_i32_64] : memref<8x!tpu.dma_semaphore, #tpu.memory_space<semaphore_mem>> -> memref<1x!tpu.dma_semaphore, #tpu.memory_space<semaphore_mem>>
    %95 = tpu.memref_squeeze %94 : memref<1x!tpu.dma_semaphore, #tpu.memory_space<semaphore_mem>> -> memref<!tpu.dma_semaphore, #tpu.memory_space<semaphore_mem>>
    tpu.wait_dma2 semaphore(%95 : memref<!tpu.dma_semaphore, #tpu.memory_space<semaphore_mem>>) src(%92 : memref<1x128xf32, #tpu.memory_space<any>>) dst(%93 : memref<1x128xf32, #tpu.memory_space<vmem>>)
    %c6_i32_69 = arith.constant 6 : i32
    %c0_i32_70 = arith.constant 0 : i32
    %c0_i32_71 = arith.constant 0 : i32
    %96 = tpu.memref_slice %arg3[%c0_i32_70, %c0_i32_71] : memref<64x128xf32, #tpu.memory_space<any>> -> memref<1x128xf32, #tpu.memory_space<any>>
    %c6_i32_72 = arith.constant 6 : i32
    %c0_i32_73 = arith.constant 0 : i32
    %97 = tpu.memref_slice %arg6[%c6_i32_72, %c0_i32_73] : memref<8x128xf32, #tpu.memory_space<vmem>> -> memref<1x128xf32, #tpu.memory_space<vmem>>
    %98 = tpu.memref_slice %arg7[%c6_i32_69] : memref<8x!tpu.dma_semaphore, #tpu.memory_space<semaphore_mem>> -> memref<1x!tpu.dma_semaphore, #tpu.memory_space<semaphore_mem>>
    %99 = tpu.memref_squeeze %98 : memref<1x!tpu.dma_semaphore, #tpu.memory_space<semaphore_mem>> -> memref<!tpu.dma_semaphore, #tpu.memory_space<semaphore_mem>>
    tpu.wait_dma2 semaphore(%99 : memref<!tpu.dma_semaphore, #tpu.memory_space<semaphore_mem>>) src(%96 : memref<1x128xf32, #tpu.memory_space<any>>) dst(%97 : memref<1x128xf32, #tpu.memory_space<vmem>>)
    %c7_i32_74 = arith.constant 7 : i32
    %c0_i32_75 = arith.constant 0 : i32
    %c0_i32_76 = arith.constant 0 : i32
    %100 = tpu.memref_slice %arg3[%c0_i32_75, %c0_i32_76] : memref<64x128xf32, #tpu.memory_space<any>> -> memref<1x128xf32, #tpu.memory_space<any>>
    %c7_i32_77 = arith.constant 7 : i32
    %c0_i32_78 = arith.constant 0 : i32
    %101 = tpu.memref_slice %arg6[%c7_i32_77, %c0_i32_78] : memref<8x128xf32, #tpu.memory_space<vmem>> -> memref<1x128xf32, #tpu.memory_space<vmem>>
    %102 = tpu.memref_slice %arg7[%c7_i32_74] : memref<8x!tpu.dma_semaphore, #tpu.memory_space<semaphore_mem>> -> memref<1x!tpu.dma_semaphore, #tpu.memory_space<semaphore_mem>>
    %103 = tpu.memref_squeeze %102 : memref<1x!tpu.dma_semaphore, #tpu.memory_space<semaphore_mem>> -> memref<!tpu.dma_semaphore, #tpu.memory_space<semaphore_mem>>
    tpu.wait_dma2 semaphore(%103 : memref<!tpu.dma_semaphore, #tpu.memory_space<semaphore_mem>>) src(%100 : memref<1x128xf32, #tpu.memory_space<any>>) dst(%101 : memref<1x128xf32, #tpu.memory_space<vmem>>)
    %c8_i32_79 = arith.constant 8 : i32
    %104 = arith.muli %arg1, %c8_i32_79 : i32
    %105 = tpu.assume_multiple %104, 8 : i32
    %106 = arith.index_cast %105 : i32 to index
    %c0 = arith.constant 0 : index
    %107 = vector.load %arg4[%106, %c0] : memref<8x128xf32, #tpu.memory_space<vmem>>, vector<8x128xf32>
    %c0_80 = arith.constant 0 : index
    %c0_81 = arith.constant 0 : index
    %108 = vector.load %arg6[%c0_80, %c0_81] : memref<8x128xf32, #tpu.memory_space<vmem>>, vector<8x128xf32>
    %109 = arith.addf %108, %107 : vector<8x128xf32>
    %c0_82 = arith.constant 0 : index
    %c0_83 = arith.constant 0 : index
    %c0_84 = arith.constant 0 : index
    %110 = vector.load %arg5[%c0_82, %c0_83, %c0_84] : memref<1x8x128xf32, #tpu.memory_space<vmem>>, vector<1x8x128xf32>
    %111 = vector.shape_cast %110 : vector<1x8x128xf32> to vector<8x128xf32>
    %112 = vector.shape_cast %109 : vector<8x128xf32> to vector<1x8x128xf32>
    tpu.vector_store %arg5[%c0_82, %c0_83, %c0_84], %112 {strides = array<i32>} : memref<1x8x128xf32, #tpu.memory_space<vmem>>, vector<1x8x128xf32>,
    return
  }
  func.func @transform_1(%arg0: i32, %arg1: i32, %arg2: memref<2x8xi32, #tpu.memory_space<smem>>) -> (i32, i32) {
    %c0_i32 = arith.constant 0 : i32
    %c0_i32_0 = arith.constant 0 : i32
    %c0_i32_1 = arith.constant 0 : i32
    return %c0_i32, %c0_i32_0 : i32, i32
  }
  func.func @transform_2(%arg0: i32, %arg1: i32, %arg2: memref<2x8xi32, #tpu.memory_space<smem>>) -> (i32, i32, i32) {
    %c0_i32 = arith.constant 0 : i32
    %c0_i32_0 = arith.constant 0 : i32
    return %arg0, %arg1, %c0_i32 : i32, i32, i32
  }
}

</mosaic_0001>

<llo_original>
// kernel: tpu_custom_call.1
$region0: #{tpu_custom_call.1}
  #allocation0 [shape = 'u32[]', space=smem, size = 0x4, offset = 0x4, fixed_abs, tag = 'smem constant byte address 0x4 - core index']
  #allocation1 [shape = 'u32[144,128]{1,0:T(1,128)}', space=vmem, size = 0x12000, scoped, tag = 'internal scratch']
  #allocation2 [shape = 'f32[8,128]{1,0:T(8,128)}', space=vmem, size = 0x1000, scoped, tag = 'scratch operand']
  #allocation3 [shape = 's32[8]{0}', space=sflag, size = 0x20, scoped, tag = 'scratch operand']
  #allocation4 [shape = 's32[1]{0}', space=sflag, size = 0x4, scoped, tag = 'scoped memory for tpu_custom_call.1']
  #allocation5 [shape = 'u8[1024]{0}', space=smem, size = 0x400, scoped, tag = 'prefetched SMEM operand 0']
  #allocation10 [shape = 's32[]', space=sflag, size = 0x4, offset = 0, fixed_abs, tag = 'sflag constant byte address 0x0 - dummy sync flag']
  #allocation11 [shape = 's32[]', space=sflag, size = 0x4, offset = 0, fixed_abs, tag = 'sflag constant byte address 0x0 - dummy sync flag']
  #allocation12 [shape = 'u32[]', space=smem, size = 0x4, offset = 0x44, fixed_abs, tag = 'smem constant byte address 0x44 - assertion arg 0']
  #allocation13 [shape = 'u32[]', space=smem, size = 0x4, offset = 0x48, fixed_abs, tag = 'smem constant byte address 0x48 - assertion arg 1']
  #allocation14 [shape = 's32[]', space=sflag, size = 0x4, offset = 0, fixed_abs, tag = 'sflag constant byte address 0x0 - dummy sync flag']
  #allocation15 [shape = 's32[]', space=sflag, size = 0x4, offset = 0, fixed_abs, tag = 'sflag constant byte address 0x0 - dummy sync flag']
  #allocation16 [shape = 's32[]', space=sflag, size = 0x4, offset = 0, fixed_abs, tag = 'sflag constant byte address 0x0 - dummy sync flag']
  #allocation17 [shape = 's32[]', space=sflag, size = 0x4, offset = 0, fixed_abs, tag = 'sflag constant byte address 0x0 - dummy sync flag']
  #allocation18 [shape = 's32[]', space=sflag, size = 0x4, offset = 0, fixed_abs, tag = 'sflag constant byte address 0x0 - dummy sync flag']
  #allocation19 [shape = 's32[]', space=sflag, size = 0x4, offset = 0, fixed_abs, tag = 'sflag constant byte address 0x0 - dummy sync flag']
  #allocation20 [shape = 's32[]', space=sflag, size = 0x4, offset = 0, fixed_abs, tag = 'sflag constant byte address 0x0 - dummy sync flag']
  #allocation21 [shape = 's32[]', space=sflag, size = 0x4, offset = 0, fixed_abs, tag = 'sflag constant byte address 0x0 - dummy sync flag']
  #allocation22 [shape = 's32[]', space=sflag, size = 0x4, offset = 0, fixed_abs, tag = 'sflag constant byte address 0x0 - dummy sync flag']
  #allocation23 [shape = 's32[]', space=sflag, size = 0x4, offset = 0, fixed_abs, tag = 'sflag constant byte address 0x0 - dummy sync flag']
  #allocation24 [shape = 's32[]', space=sflag, size = 0x4, offset = 0, fixed_abs, tag = 'sflag constant byte address 0x0 - dummy sync flag']
  #allocation25 [shape = 's32[]', space=sflag, size = 0x4, offset = 0, fixed_abs, tag = 'sflag constant byte address 0x0 - dummy sync flag']
  #allocation26 [shape = 's32[]', space=sflag, size = 0x4, offset = 0, fixed_abs, tag = 'sflag constant byte address 0x0 - dummy sync flag']
  #allocation27 [shape = 's32[]', space=sflag, size = 0x4, offset = 0, fixed_abs, tag = 'sflag constant byte address 0x0 - dummy sync flag']
  %s0 = inlined_call_operand.hbm [shape: s32[2,8], index: 0, kind: input, shape index: {}]
  %s1 = inlined_call_operand.hbm [shape: f32[64,128], index: 1, kind: input, shape index: {}]
  %s2 = inlined_call_operand.hbm [shape: f32[8,128], index: 2, kind: input, shape index: {}]
  %s3 = inlined_call_operand.hbm [shape: f32[2,8,128], index: 3, kind: output, shape index: {}]
  %s4 = sld [smem:[#allocation0]]
  $region73: #{tpu_custom_call.1} parent=0
    _
  %s6 = ssub.s32 1, %s4
  %s7 = scalar_select 0, %s6, %s4
  %9 = dma.hbm_to_smem %s0, 32, [#allocation5], [#allocation4]
  %10 = dma.done [#allocation4], 32
  %11 = sfence
  $region1: #{tpu_custom_call.1} parent=0
    #allocation6 [shape = 'u8[4096]{0}', space=vmem, size = 0x1000, scoped, tag = 'input window, operand 2, single buffered']
    #allocation7 [shape = 's32[2]{0}', space=sflag, size = 0x8, scoped, tag = 'scoped memory for tpu_custom_call.1']
    #allocation8 [shape = 's32[2]{0}', space=sflag, size = 0x8, scoped, tag = 'scoped memory for tpu_custom_call.1']
    #allocation9 [shape = 'u8[8192]{0}', space=vmem, size = 0x2000, scoped, tag = 'output window, operand 0']
    %12 = vsyncpa [#allocation7], 0
    %13 = vsyncpa [#allocation8], 0
    %s14 = scalar_lea.sflag [#allocation8], 1
    %15 = vsyncpa %s14, 0
    loop: start=0, step=1, limit=4
    $region2: #{tpu_custom_call.1} parent=1 // loop_pre_header
      _
    $region3: #{tpu_custom_call.1} parent=1 // loop_header
      %s17 = sphi 0, %s21
      %p18 = scmp.ge.s32.totalorder %s17, 4
      %s24 = sphi 0, %s36
      %s25 = sphi 0, %s32
      %s26 = sphi 0, %s24
      %s27 = sphi 0, %s25
      %s28 = sphi 0, %s26
      %s29 = sphi 0, %s27
      %s37 = sphi 0, %s37
      %s39 = sphi 0, %s37
      %s40 = sphi 0, %s39
      %s54 = sphi 0, %s40
      %s62 = sphi 0, %s64
      %s65 = sphi 0, %s62
      %s66 = sphi 0, %s65
      %s82 = sphi 0, %s66
    $region4: #{tpu_custom_call.1} parent=1 // loop_header_branch
      %20 = sbr.rel (%p18) target = $region8
    $region5: #{tpu_custom_call.1} parent=1 // loop_body
      %s22 = ssub.s32 %s17, 1
      %s23 = ssub.s32 %s17, 2
      %s30 = sadd.s32 1, %s25
      %p31 = scmp.ge.s32.totalorder %s30, 1
      %s32 = scalar_select %p31, 0, %s30
      %s33 = sadd.s32 1, %s24
      %s34 = scalar_select %p31, %s33, %s24
      %p35 = scmp.ge.s32.totalorder %s34, 2
      %s36 = scalar_select %p35, 0, %s34
      %s38 = sadd.s32 %s37, 1
      %p41 = scmp.eq.s32.totalorder %s17, 1
      %p42 = scmp.ne.s32.totalorder %s37, %s39
      %p43 = scmp.eq.s32.totalorder %s17, 0
      %p44 = por %p42, %p43
      %p45 = scmp.ne.s32.totalorder %s37, %s39
      %p46 = scmp.eq.s32.totalorder %s22, 1
      %p47 = por %p45, %p46
      %p48 = scmp.ne.s32.totalorder %s39, %s40
      %p49 = scmp.eq.s32.totalorder %s22, 0
      %p50 = por %p48, %p49
      %p51 = scmp.ne.s32.totalorder %s39, %s40
      %p52 = scmp.eq.s32.totalorder %s23, 1
      %p53 = por %p51, %p52
      %p55 = scmp.ne.s32.totalorder %s40, %s54
      %p56 = scmp.eq.s32.totalorder %s23, 0
      %p57 = por %p55, %p56
      %s58 = ssub.s32 %s24, %s36
      %s59 = ssub.s32 %s25, %s32
      %s60 = sor.u32 %s58, %s59
      %p61 = scmp.eq.s32.totalorder %s60, 0
      %s63 = sadd.s32 %s62, 1
      %s64 = scalar_select %p61, %s62, %s63
      %p67 = pneg %p61
      %p68 = scmp.eq.s32.totalorder %s17, 1
      %p69 = por %p67, %p68
      %p70 = scmp.ne.s32.totalorder %s62, %s65
      %p71 = scmp.eq.s32.totalorder %s17, 0
      %p72 = por %p70, %p71
      %p73 = scmp.ne.s32.totalorder %s62, %s65
      %p74 = scmp.eq.s32.totalorder %s22, 1
      %p75 = por %p73, %p74
      %p76 = scmp.ne.s32.totalorder %s65, %s66
      %p77 = scmp.eq.s32.totalorder %s22, 0
      %p78 = por %p76, %p77
      %p79 = scmp.ne.s32.totalorder %s65, %s66
      %p80 = scmp.eq.s32.totalorder %s23, 1
      %p81 = por %p79, %p80
      %p83 = scmp.ne.s32.totalorder %s66, %s82
      %p84 = scmp.eq.s32.totalorder %s23, 0
      %p85 = por %p83, %p84
      %p86 = scmp.le.s32.totalorder 1, %s17
      %p87 = scmp.lt.s32.totalorder %s17, 3
      %p88 = pnand %p86, %p87
      %p89 = pneg %p88
      // Predicated region
      $region9: #{tpu_custom_call.1} parent=5 // pred_check
        _
      $region10: #{tpu_custom_call.1} parent=5 // pred_check_branch
        %91 = sbr.rel (%p88) target = $region12
      $region11: #{tpu_custom_call.1} parent=5 // pred_region
        %s92 = ssub.s32 %s17, 1
        // Predicated region
        $region13: #{tpu_custom_call.1} parent=11 // pred_check
          %p93 = pneg %p50
        $region14: #{tpu_custom_call.1} parent=11 // pred_check_branch
          %95 = sbr.rel (%p93) target = $region16
        $region15: #{tpu_custom_call.1} parent=11 // pred_region
          %s97 = ssub.s32 128, 128
          %98 = vsyncadd [#allocation7], %s97
          %s100 = sshll.u32 [#allocation6], 4
          %s101 = int_to_ptr.vmem [resolvable:$true] %s100
          %103 = dma.hbm_to_vmem [thread:$0]  %s2, 128, %s101, [#allocation7]
        $region16: #{tpu_custom_call.1} parent=11 // pred_fallthru
          _
      $region12: #{tpu_custom_call.1} parent=5 // pred_fallthru
        _
      %p104 = scmp.lt.s32.totalorder %s17, 2
      // Predicated region
      $region17: #{tpu_custom_call.1} parent=5 // pred_check
        %p105 = pneg %p104
      $region18: #{tpu_custom_call.1} parent=5 // pred_check_branch
        %107 = sbr.rel (%p105) target = $region20
      $region19: #{tpu_custom_call.1} parent=5 // pred_region
        _
      $region20: #{tpu_custom_call.1} parent=5 // pred_fallthru
        _
      %p108 = scmp.le.s32.totalorder 1, %s17
      %p109 = scmp.lt.s32.totalorder %s17, 3
      %p110 = pnand %p108, %p109
      %p111 = pneg %p110
      // Predicated region
      $region21: #{tpu_custom_call.1} parent=5 // pred_check
        _
      $region22: #{tpu_custom_call.1} parent=5 // pred_check_branch
        %113 = sbr.rel (%p110) target = $region24
      $region23: #{tpu_custom_call.1} parent=5 // pred_region
        %s114 = ssub.s32 %s17, 1
        // Predicated region
        $region25: #{tpu_custom_call.1} parent=23 // pred_check
          %p115 = pneg %p50
        $region26: #{tpu_custom_call.1} parent=23 // pred_check_branch
          %117 = sbr.rel (%p115) target = $region28
        $region27: #{tpu_custom_call.1} parent=23 // pred_region
          %118 = dma.done [#allocation7], 128
        $region28: #{tpu_custom_call.1} parent=23 // pred_fallthru
          _
        %p119 = pneg %p50
        %p120 = pneg %p47
        %p121 = pneg %p78
        %p122 = pneg %p75
        %s123 = sand.u32 %s65, 1
        %s124 = scalar_lea.sflag [#allocation8], %s123
        %s125 = sand.u32 %s65, 1
        %s126 = smul.addr %s125, 8
        %s127 = scalar_lea.vmem [#allocation9], %s126
        %s128 = smul.u32 %s27, 8
        %s129 = sshra.s32 %s128, 7
        %s130 = sand.u32 %s128, 127
        %s131 = sadd.s32 %s129, %s26
        %s132 = smul.u32 %s131, 128
        %s133 = sshra.s32 %s128, 7
        %s134 = sand.u32 %s128, 127
        %s135 = sadd.s32 %s132, %s134
        %s136 = sld [smem:[#allocation5 + %s135]]
        %s137 = smul.addr %s136, 16
        %s138 = scalar_lea.hbm %s1, %s137
        // Predicated region
        $region29: #{tpu_custom_call.1} parent=23 // pred_check
          _
        $region30: #{tpu_custom_call.1} parent=23 // pred_check_branch
          %140 = sbr.rel target = $region32
        $region31: #{tpu_custom_call.1} parent=23 // pred_region
          %141 = sst [smem:[#allocation12]] [#allocation11]
          %142 = sst [smem:[#allocation13]] [#allocation10]
        $region32: #{tpu_custom_call.1} parent=23 // pred_fallthru
          _
        %144 = shalt.err (0)
        %s146 = sshll.u32 [#allocation2], 4
        %s147 = int_to_ptr.vmem [resolvable:$true] %s146
        %149 = dma.hbm_to_vmem [thread:$0]  %s138, 16, %s147, [#allocation3]
        %s150 = sadd.s32 %s128, 1
        %s151 = sshra.s32 %s150, 7
        %s152 = sand.u32 %s150, 127
        %s153 = sadd.s32 %s151, %s26
        %s154 = smul.u32 %s153, 128
        %s155 = sshra.s32 %s150, 7
        %s156 = sand.u32 %s150, 127
        %s157 = sadd.s32 %s154, %s156
        %s158 = sld [smem:[#allocation5 + %s157]]
        %s159 = smul.addr %s158, 16
        %s160 = scalar_lea.hbm %s1, %s159
        %s161 = scalar_lea.vmem [#allocation2], 1
        %s162 = scalar_lea.sflag [#allocation3], 1
        // Predicated region
        $region33: #{tpu_custom_call.1} parent=23 // pred_check
          _
        $region34: #{tpu_custom_call.1} parent=23 // pred_check_branch
          %164 = sbr.rel target = $region36
        $region35: #{tpu_custom_call.1} parent=23 // pred_region
          %165 = sst [smem:[#allocation12]] [#allocation15]
          %166 = sst [smem:[#allocation13]] [#allocation14]
        $region36: #{tpu_custom_call.1} parent=23 // pred_fallthru
          _
        %168 = shalt.err (0)
        %s170 = sshll.u32 %s161, 4
        %s171 = int_to_ptr.vmem [resolvable:$true] %s170
        %173 = dma.hbm_to_vmem [thread:$0]  %s160, 16, %s171, %s162
        %s174 = sadd.s32 %s128, 2
        %s175 = sshra.s32 %s174, 7
        %s176 = sand.u32 %s174, 127
        %s177 = sadd.s32 %s175, %s26
        %s178 = smul.u32 %s177, 128
        %s179 = sshra.s32 %s174, 7
        %s180 = sand.u32 %s174, 127
        %s181 = sadd.s32 %s178, %s180
        %s182 = sld [smem:[#allocation5 + %s181]]
        %s183 = smul.addr %s182, 16
        %s184 = scalar_lea.hbm %s1, %s183
        %s185 = scalar_lea.vmem [#allocation2], 2
        %s186 = scalar_lea.sflag [#allocation3], 2
        // Predicated region
        $region37: #{tpu_custom_call.1} parent=23 // pred_check
          _
        $region38: #{tpu_custom_call.1} parent=23 // pred_check_branch
          %188 = sbr.rel target = $region40
        $region39: #{tpu_custom_call.1} parent=23 // pred_region
          %189 = sst [smem:[#allocation12]] [#allocation17]
          %190 = sst [smem:[#allocation13]] [#allocation16]
        $region40: #{tpu_custom_call.1} parent=23 // pred_fallthru
          _
        %192 = shalt.err (0)
        %s194 = sshll.u32 %s185, 4
        %s195 = int_to_ptr.vmem [resolvable:$true] %s194
        %197 = dma.hbm_to_vmem [thread:$0]  %s184, 16, %s195, %s186
        %s198 = sadd.s32 %s128, 3
        %s199 = sshra.s32 %s198, 7
        %s200 = sand.u32 %s198, 127
        %s201 = sadd.s32 %s199, %s26
        %s202 = smul.u32 %s201, 128
        %s203 = sshra.s32 %s198, 7
        %s204 = sand.u32 %s198, 127
        %s205 = sadd.s32 %s202, %s204
        %s206 = sld [smem:[#allocation5 + %s205]]
        %s207 = smul.addr %s206, 16
        %s208 = scalar_lea.hbm %s1, %s207
        %s209 = scalar_lea.vmem [#allocation2], 3
        %s210 = scalar_lea.sflag [#allocation3], 3
        // Predicated region
        $region41: #{tpu_custom_call.1} parent=23 // pred_check
          _
        $region42: #{tpu_custom_call.1} parent=23 // pred_check_branch
          %212 = sbr.rel target = $region44
        $region43: #{tpu_custom_call.1} parent=23 // pred_region
          %213 = sst [smem:[#allocation12]] [#allocation19]
          %214 = sst [smem:[#allocation13]] [#allocation18]
        $region44: #{tpu_custom_call.1} parent=23 // pred_fallthru
          _
        %216 = shalt.err (0)
        %s218 = sshll.u32 %s209, 4
        %s219 = int_to_ptr.vmem [resolvable:$true] %s218
        %221 = dma.hbm_to_vmem [thread:$0]  %s208, 16, %s219, %s210
        %s222 = sadd.s32 %s128, 4
        %s223 = sshra.s32 %s222, 7
        %s224 = sand.u32 %s222, 127
        %s225 = sadd.s32 %s223, %s26
        %s226 = smul.u32 %s225, 128
        %s227 = sshra.s32 %s222, 7
        %s228 = sand.u32 %s222, 127
        %s229 = sadd.s32 %s226, %s228
        %s230 = sld [smem:[#allocation5 + %s229]]
        %s231 = smul.addr %s230, 16
        %s232 = scalar_lea.hbm %s1, %s231
        %s233 = scalar_lea.vmem [#allocation2], 4
        %s234 = scalar_lea.sflag [#allocation3], 4
        // Predicated region
        $region45: #{tpu_custom_call.1} parent=23 // pred_check
          _
        $region46: #{tpu_custom_call.1} parent=23 // pred_check_branch
          %236 = sbr.rel target = $region48
        $region47: #{tpu_custom_call.1} parent=23 // pred_region
          %237 = sst [smem:[#allocation12]] [#allocation21]
          %238 = sst [smem:[#allocation13]] [#allocation20]
        $region48: #{tpu_custom_call.1} parent=23 // pred_fallthru
          _
        %240 = shalt.err (0)
        %s242 = sshll.u32 %s233, 4
        %s243 = int_to_ptr.vmem [resolvable:$true] %s242
        %245 = dma.hbm_to_vmem [thread:$0]  %s232, 16, %s243, %s234
        %s246 = sadd.s32 %s128, 5
        %s247 = sshra.s32 %s246, 7
        %s248 = sand.u32 %s246, 127
        %s249 = sadd.s32 %s247, %s26
        %s250 = smul.u32 %s249, 128
        %s251 = sshra.s32 %s246, 7
        %s252 = sand.u32 %s246, 127
        %s253 = sadd.s32 %s250, %s252
        %s254 = sld [smem:[#allocation5 + %s253]]
        %s255 = smul.addr %s254, 16
        %s256 = scalar_lea.hbm %s1, %s255
        %s257 = scalar_lea.vmem [#allocation2], 5
        %s258 = scalar_lea.sflag [#allocation3], 5
        // Predicated region
        $region49: #{tpu_custom_call.1} parent=23 // pred_check
          _
        $region50: #{tpu_custom_call.1} parent=23 // pred_check_branch
          %260 = sbr.rel target = $region52
        $region51: #{tpu_custom_call.1} parent=23 // pred_region
          %261 = sst [smem:[#allocation12]] [#allocation23]
          %262 = sst [smem:[#allocation13]] [#allocation22]
        $region52: #{tpu_custom_call.1} parent=23 // pred_fallthru
          _
        %264 = shalt.err (0)
        %s266 = sshll.u32 %s257, 4
        %s267 = int_to_ptr.vmem [resolvable:$true] %s266
        %269 = dma.hbm_to_vmem [thread:$0]  %s256, 16, %s267, %s258
        %s270 = sadd.s32 %s128, 6
        %s271 = sshra.s32 %s270, 7
        %s272 = sand.u32 %s270, 127
        %s273 = sadd.s32 %s271, %s26
        %s274 = smul.u32 %s273, 128
        %s275 = sshra.s32 %s270, 7
        %s276 = sand.u32 %s270, 127
        %s277 = sadd.s32 %s274, %s276
        %s278 = sld [smem:[#allocation5 + %s277]]
        %s279 = smul.addr %s278, 16
        %s280 = scalar_lea.hbm %s1, %s279
        %s281 = scalar_lea.vmem [#allocation2], 6
        %s282 = scalar_lea.sflag [#allocation3], 6
        // Predicated region
        $region53: #{tpu_custom_call.1} parent=23 // pred_check
          _
        $region54: #{tpu_custom_call.1} parent=23 // pred_check_branch
          %284 = sbr.rel target = $region56
        $region55: #{tpu_custom_call.1} parent=23 // pred_region
          %285 = sst [smem:[#allocation12]] [#allocation25]
          %286 = sst [smem:[#allocation13]] [#allocation24]
        $region56: #{tpu_custom_call.1} parent=23 // pred_fallthru
          _
        %288 = shalt.err (0)
        %s290 = sshll.u32 %s281, 4
        %s291 = int_to_ptr.vmem [resolvable:$true] %s290
        %293 = dma.hbm_to_vmem [thread:$0]  %s280, 16, %s291, %s282
        %s294 = sadd.s32 %s128, 7
        %s295 = sshra.s32 %s294, 7
        %s296 = sand.u32 %s294, 127
        %s297 = sadd.s32 %s295, %s26
        %s298 = smul.u32 %s297, 128
        %s299 = sshra.s32 %s294, 7
        %s300 = sand.u32 %s294, 127
        %s301 = sadd.s32 %s298, %s300
        %s302 = sld [smem:[#allocation5 + %s301]]
        %s303 = smul.addr %s302, 16
        %s304 = scalar_lea.hbm %s1, %s303
        %s305 = scalar_lea.vmem [#allocation2], 7
        %s306 = scalar_lea.sflag [#allocation3], 7
        // Predicated region
        $region57: #{tpu_custom_call.1} parent=23 // pred_check
          _
        $region58: #{tpu_custom_call.1} parent=23 // pred_check_branch
          %308 = sbr.rel target = $region60
        $region59: #{tpu_custom_call.1} parent=23 // pred_region
          %309 = sst [smem:[#allocation12]] [#allocation27]
          %310 = sst [smem:[#allocation13]] [#allocation26]
        $region60: #{tpu_custom_call.1} parent=23 // pred_fallthru
          _
        %312 = shalt.err (0)
        %s314 = sshll.u32 %s305, 4
        %s315 = int_to_ptr.vmem [resolvable:$true] %s314
        %317 = dma.hbm_to_vmem [thread:$0]  %s304, 16, %s315, %s306
        %s318 = smul.u32 1, 1
        %s319 = sshll.u32 %s318, 4
        %320 = dma.done [#allocation3], %s319
        %s321 = sshll.u32 %s318, 4
        %322 = dma.done %s162, %s321
        %s323 = sshll.u32 %s318, 4
        %324 = dma.done %s186, %s323
        %s325 = sshll.u32 %s318, 4
        %326 = dma.done %s210, %s325
        %s327 = sshll.u32 %s318, 4
        %328 = dma.done %s234, %s327
        %s329 = sshll.u32 %s318, 4
        %330 = dma.done %s258, %s329
        %s331 = sshll.u32 %s318, 4
        %332 = dma.done %s282, %s331
        %s333 = sshll.u32 %s318, 4
        %334 = dma.done %s306, %s333
        %s335 = scalar_lea.vmem [#allocation6], %s128
        %v336 = vld [vmem:[%s335] sm:$0xff]
        %v337 = vld [vmem:[#allocation2] sm:$0xff]
        %v338 = vadd.f32 %v337, %v336
        %339 = vst [vmem:[%s127] sm:$0xff] %v338
        %s340 = sand.u32 %s65, 1
        %s341 = scalar_lea.sflag [#allocation8], %s340
        %s342 = sand.u32 %s65, 1
        %s343 = smul.addr %s342, 8
        %s344 = scalar_lea.vmem [#allocation9], %s343
        // Predicated region
        $region61: #{tpu_custom_call.1} parent=23 // pred_check
          %p345 = pneg %p75
        $region62: #{tpu_custom_call.1} parent=23 // pred_check_branch
          %347 = sbr.rel (%p345) target = $region64
        $region63: #{tpu_custom_call.1} parent=23 // pred_region
          %s349 = ssub.s32 128, 128
          %350 = vsyncadd %s341, %s349
          %s351 = sadd.s32 %s27, %s26
          %s352 = smul.addr %s351, 128
          %s353 = scalar_lea.hbm %s3, %s352
          %s355 = sshll.u32 %s344, 4
          %s356 = int_to_ptr.vmem [resolvable:$true] %s355
          %358 = dma.vmem_to_hbm [thread:$0]  %s356, 128, %s353, %s341
        $region64: #{tpu_custom_call.1} parent=23 // pred_fallthru
          _
      $region24: #{tpu_custom_call.1} parent=5 // pred_fallthru
        _
      %p359 = scmp.le.s32.totalorder 2, %s17
      // Predicated region
      $region65: #{tpu_custom_call.1} parent=5 // pred_check
        %p360 = pneg %p359
      $region66: #{tpu_custom_call.1} parent=5 // pred_check_branch
        %362 = sbr.rel (%p360) target = $region68
      $region67: #{tpu_custom_call.1} parent=5 // pred_region
        %s363 = ssub.s32 %s17, 2
        // Predicated region
        $region69: #{tpu_custom_call.1} parent=67 // pred_check
          %p364 = pneg %p81
        $region70: #{tpu_custom_call.1} parent=67 // pred_check_branch
          %366 = sbr.rel (%p364) target = $region72
        $region71: #{tpu_custom_call.1} parent=67 // pred_region
          %s367 = sand.u32 %s66, 1
          %s368 = scalar_lea.sflag [#allocation8], %s367
          %s369 = sand.u32 %s66, 1
          %s370 = smul.addr %s369, 8
          %s371 = scalar_lea.vmem [#allocation9], %s370
          %372 = dma.done %s368, 128
        $region72: #{tpu_custom_call.1} parent=67 // pred_fallthru
          _
      $region68: #{tpu_custom_call.1} parent=5 // pred_fallthru
        _
    $region6: #{tpu_custom_call.1} parent=1 // loop_footer
      %s21 = sadd.s32 1, %s17
    $region7: #{tpu_custom_call.1} parent=1 // loop_footer_branch
      %16 = sbr.rel target = $region3
    $region8: #{tpu_custom_call.1} parent=1 // loop_exit
      _
    %373 = vsyncpa [#allocation7], 1
    %s374 = scalar_lea.sflag [#allocation7], 1
    %375 = vsyncpa %s374, 1
    %376 = vsyncpa [#allocation8], 1
    %s377 = scalar_lea.sflag [#allocation8], 1
    %378 = vsyncpa %s377, 1
  %379 = vsyncmov [#allocation3]
  %s380 = vpop.sfrf %379
  %p381 = scmp.eq.s32.totalorder %s380, 0
  %p382 = pneg %p381
  %384 = shalt.err (%p382)
  %s385 = scalar_lea.sflag [#allocation3], 1
  %386 = vsyncmov %s385
  %s387 = vpop.sfrf %386
  %p388 = scmp.eq.s32.totalorder %s387, 0
  %p389 = pneg %p388
  %391 = shalt.err (%p389)
  %s392 = scalar_lea.sflag [#allocation3], 2
  %393 = vsyncmov %s392
  %s394 = vpop.sfrf %393
  %p395 = scmp.eq.s32.totalorder %s394, 0
  %p396 = pneg %p395
  %398 = shalt.err (%p396)
  %s399 = scalar_lea.sflag [#allocation3], 3
  %400 = vsyncmov %s399
  %s401 = vpop.sfrf %400
  %p402 = scmp.eq.s32.totalorder %s401, 0
  %p403 = pneg %p402
  %405 = shalt.err (%p403)
  %s406 = scalar_lea.sflag [#allocation3], 4
  %407 = vsyncmov %s406
  %s408 = vpop.sfrf %407
  %p409 = scmp.eq.s32.totalorder %s408, 0
  %p410 = pneg %p409
  %412 = shalt.err (%p410)
  %s413 = scalar_lea.sflag [#allocation3], 5
  %414 = vsyncmov %s413
  %s415 = vpop.sfrf %414
  %p416 = scmp.eq.s32.totalorder %s415, 0
  %p417 = pneg %p416
  %419 = shalt.err (%p417)
  %s420 = scalar_lea.sflag [#allocation3], 6
  %421 = vsyncmov %s420
  %s422 = vpop.sfrf %421
  %p423 = scmp.eq.s32.totalorder %s422, 0
  %p424 = pneg %p423
  %426 = shalt.err (%p424)
  %s427 = scalar_lea.sflag [#allocation3], 7
  %428 = vsyncmov %s427
  %s429 = vpop.sfrf %428
  %p430 = scmp.eq.s32.totalorder %s429, 0
  %p431 = pneg %p430
  %433 = shalt.err (%p431)

</llo_original>
